<compile_context>
chip_gen: v6e
topology: v6e:2x2x1
jax: 0.10.0
libtpu: 0.0.40
codegen_flags: <defaults>
</compile_context>

<pallas_src>
import functools

import jax
import jax.numpy as jnp
from jax.experimental import pallas as pl
from jax.experimental.pallas import tpu as pltpu


def _round_up(x, m):
    return (x + m - 1) // m * m


def _choose_block_h(hp, block_h):
    """Pick a hidden-tile size: multiple of 128 that divides the padded H."""
    tn = min(block_h, hp)
    tn = max(128, tn - tn % 128)
    while hp % tn:
        tn -= 128
    return tn


def _vmem_ceiling():
    """Generation-aware scoped-VMEM ceiling (leave headroom for Mosaic)."""
    cap = 64 << 20                       # safe everywhere (v7x: 64 MiB / TC)
    try:
        info = pltpu.get_tpu_info()
        cap = int(getattr(info, "vmem_capacity_bytes", cap))
    except Exception:
        pass
    return int(cap * 0.85)


# --------------------------------------------------------------------------
# Kernel: one fused GEMM + gate nonlinearities + cell update per (tn, tb) tile
# --------------------------------------------------------------------------
def lstm_cell_kernel(xh_ref, c_ref, w_ref, b_ref, h_new_ref, c_new_ref):
    tn = h_new_ref.shape[1]

    # Single MXU pass: [x, h] @ [Wx; Wh] for all four gates of this tile.
    # Accumulate in f32 regardless of operand dtype (bf16 or f32).
    gates = jnp.dot(xh_ref[...], w_ref[...],
                    preferred_element_type=jnp.float32)
    gates = gates + b_ref[...]                      # (tb, 4*tn) f32

    # Gate slices are 128-lane aligned (tn is a multiple of 128).
    # Column order within the tile block: [i | g | f | o].
    i_gate = jax.nn.sigmoid(gates[:, 0 * tn:1 * tn])
    g_gate = jnp.tanh(gates[:, 1 * tn:2 * tn])
    f_gate = jax.nn.sigmoid(gates[:, 2 * tn:3 * tn])
    o_gate = jnp.sigmoid(gates[:, 3 * tn:4 * tn]) if False else \
        jax.nn.sigmoid(gates[:, 3 * tn:4 * tn])

    # Elementwise section stays f32 (v5e VPU/EUP have no bf16 path).
    c_new = f_gate * c_ref[...] + i_gate * g_gate
    h_new_ref[...] = o_gate * jnp.tanh(c_new)
    c_new_ref[...] = c_new


# --------------------------------------------------------------------------
# Wrapper: padding / fusion glue + tiled pallas_call
# --------------------------------------------------------------------------
@functools.partial(jax.jit,
                   static_argnames=("hidden_size", "tn", "mm_dtype",
                                    "block_b"))
def lstm_cell(x, h, c, w, b, *, hidden_size, tn, mm_dtype=jnp.bfloat16,
              block_b=512):
    B, I = x.shape
    H = hidden_size
    Kp, N4 = w.shape
    Hp = N4 // 4
    assert Hp % tn == 0, "tn must come from pack_params (gate-tile layout)"

    mm_bytes = jnp.dtype(mm_dtype).itemsize
    # bf16 packs 16 rows per sublane-packed vreg; f32 packs 8.
    row_round = 16 if mm_bytes == 2 else 8
    Br = _round_up(B, row_round)
    tb = min(block_b, Br)
    Bp = _round_up(Br, tb)

    # ---- plain-JAX glue: fuse [x, h] along features, pad to tile sizes ----
    xh = jnp.concatenate([x, h], axis=1)                       # (B, I+H)
    xh = jnp.pad(xh, ((0, Bp - B), (0, Kp - (I + H)))).astype(mm_dtype)
    w_mm = w.astype(mm_dtype)           # bf16 halves weight HBM/VMEM bytes
    c_pad = jnp.pad(c, ((0, Bp - B), (0, Hp - H))).astype(jnp.float32)

    # Hidden axis OUTER, batch axis inner (fastest): the weight block index
    # (0, j) is constant along the inner axis -> weights DMAed once per
    # hidden tile and kept VMEM-resident across all batch tiles.
    grid = (Hp // tn, Bp // tb)

    # Explicit scoped-VMEM budget: double-buffered tiles + live gates.
    per_step = (tb * Kp * mm_bytes             # xh tile
                + Kp * 4 * tn * mm_bytes       # fused weight tile
                + tb * tn * 4                  # cell-state tile
                + 4 * tn * 4                   # bias tile
                + 2 * tb * tn * 4)             # h_new, c_new tiles
    gates_live = 2 * tb * 4 * tn * 4           # gates intermediate + temps
    vmem_limit = int(min(max(2 * per_step + gates_live + (4 << 20),
                             32 << 20),
                         _vmem_ceiling()))

    h_new, c_new = pl.pallas_call(
        lstm_cell_kernel,
        out_shape=(jax.ShapeDtypeStruct((Bp, Hp), jnp.float32),
                   jax.ShapeDtypeStruct((Bp, Hp), jnp.float32)),
        grid=grid,
        in_specs=[
            pl.BlockSpec((tb, Kp), lambda j, i: (i, 0)),       # fused [x, h]
            pl.BlockSpec((tb, tn), lambda j, i: (i, j)),       # cell state
            pl.BlockSpec((Kp, 4 * tn), lambda j, i: (0, j)),   # fused weights
            pl.BlockSpec((1, 4 * tn), lambda j, i: (0, j)),    # fused bias
        ],
        out_specs=(pl.BlockSpec((tb, tn), lambda j, i: (i, j)),
                   pl.BlockSpec((tb, tn), lambda j, i: (i, j))),
        input_output_aliases={1: 1},            # reuse c buffer for c_new
        compiler_params=pltpu.CompilerParams(
            # hidden axis sharded across v7x's 2 TCs (each core streams only
            # half the weight columns); batch is the sequential inner loop.
            dimension_semantics=("parallel", "arbitrary"),
            vmem_limit_bytes=vmem_limit),
    )(xh, c_pad, w_mm, b)

    return h_new[:B, :H], c_new[:B, :H]


# --------------------------------------------------------------------------
# Parameter construction (mirrors the PyTorch module) + packing glue
# --------------------------------------------------------------------------
def init_params(key, input_size, hidden_size):
    """Eight Linear layers (x2i, x2g, x2f, x2o, h2i, h2g, h2f, h2o) with
    PyTorch-style uniform init; x2f.bias and h2f.bias overridden to 1.0
    (as in _init_weights).  Gate order: [i, g, f, o]."""
    keys = jax.random.split(key, 16)
    I, H = input_size, hidden_size

    def linear(kw, kb, fan_in):
        bound = 1.0 / jnp.sqrt(fan_in)
        wgt = jax.random.uniform(kw, (H, fan_in), jnp.float32, -bound, bound)
        bia = jax.random.uniform(kb, (H,), jnp.float32, -bound, bound)
        return wgt, bia

    x_ws, x_bs, h_ws, h_bs = [], [], [], []
    for gi in range(4):
        wxg, bxg = linear(keys[gi * 2], keys[gi * 2 + 1], I)
        whg, bhg = linear(keys[8 + gi * 2], keys[8 + gi * 2 + 1], H)
        x_ws.append(wxg); x_bs.append(bxg)
        h_ws.append(whg); h_bs.append(bhg)

    # forget-gate biases = 1.0 (gate index 2)
    x_bs[2] = jnp.ones((H,), jnp.float32)
    h_bs[2] = jnp.ones((H,), jnp.float32)
    return x_ws, x_bs, h_ws, h_bs


def pack_params(x_ws, x_bs, h_ws, h_bs, input_size, hidden_size, *,
                block_h=256):
    """Pack the 8 Linear layers into one fused GEMM operand.

    K axis: [input features ; hidden features], zero-padded to a multiple of
    128.  N axis: for each hidden tile of size tn, the four gates' columns
    are laid out contiguously as [i | g | f | o], so a single (Kp, 4*tn)
    weight block contains everything needed to finish c_new/h_new for that
    tile.  Biases (bx + bh per gate) follow the same column layout.

    Returns (w, b, tn); the returned tn MUST be passed to lstm_cell so the
    kernel tiling matches the packed column layout.
    """
    I, H = input_size, hidden_size
    K = I + H
    Kp = _round_up(K, 128)
    Hp = _round_up(H, 128)
    tn = _choose_block_h(Hp, block_h)

    per_gate_w, per_gate_b = [], []
    for g in range(4):
        wk = jnp.concatenate([x_ws[g].T, h_ws[g].T], axis=0)    # (K, H)
        wk = jnp.pad(wk, ((0, Kp - K), (0, Hp - H)))
        per_gate_w.append(wk)
        per_gate_b.append(jnp.pad(x_bs[g] + h_bs[g], (0, Hp - H)))

    w_cols, b_cols = [], []
    for t in range(Hp // tn):
        sl = slice(t * tn, (t + 1) * tn)
        for g in range(4):
            w_cols.append(per_gate_w[g][:, sl])
            b_cols.append(per_gate_b[g][sl])
    w = jnp.concatenate(w_cols, axis=1)                         # (Kp, 4*Hp)
    b = jnp.concatenate(b_cols)[None, :]                        # (1, 4*Hp)
    return w, b, tn


# --------------------------------------------------------------------------
# Pure-JAX reference matching the PyTorch forward exactly
# --------------------------------------------------------------------------
def reference_lstm(x, h, c, x_ws, x_bs, h_ws, h_bs):
    def lin(v, wgt, bia):
        return v @ wgt.T + bia
    i_g = jax.nn.sigmoid(lin(x, x_ws[0], x_bs[0]) + lin(h, h_ws[0], h_bs[0]))
    g_g = jnp.tanh(lin(x, x_ws[1], x_bs[1]) + lin(h, h_ws[1], h_bs[1]))
    f_g = jax.nn.sigmoid(lin(x, x_ws[2], x_bs[2]) + lin(h, h_ws[2], h_bs[2]))
    o_g = jax.nn.sigmoid(lin(x, x_ws[3], x_bs[3]) + lin(h, h_ws[3], h_bs[3]))
    c_new = f_g * c + i_g * g_g
    h_new = o_g * jnp.tanh(c_new)
    return h_new, c_new


if __name__ == "__main__":
    B, I, H = 8, 16, 32

    key = jax.random.PRNGKey(0)
    kx, kh, kc, kp = jax.random.split(key, 4)
    x = jax.random.normal(kx, (B, I), jnp.float32)
    h = jax.random.normal(kh, (B, H), jnp.float32)
    c = jax.random.normal(kc, (B, H), jnp.float32)

    x_ws, x_bs, h_ws, h_bs = init_params(kp, I, H)
    w, b, tn = pack_params(x_ws, x_bs, h_ws, h_bs, I, H)

    h_ref, c_ref = reference_lstm(x, h, c, x_ws, x_bs, h_ws, h_bs)

    # Default path: bf16 GEMM operands (MXU fast path on every generation),
    # f32 accumulation + f32 gate/cell math.
    h_bf, c_bf = lstm_cell(x, h, c, w, b, hidden_size=H, tn=tn)
    jax.block_until_ready((h_bf, c_bf))
    assert jnp.allclose(h_bf, h_ref, atol=5e-2, rtol=5e-2)
    assert jnp.allclose(c_bf, c_ref, atol=5e-2, rtol=5e-2)

    # f32 GEMM path: tight numerical check of the packing / tiling layout.
    h_f32, c_f32 = lstm_cell(x, h, c, w, b, hidden_size=H, tn=tn,
                             mm_dtype=jnp.float32)
    jax.block_until_ready((h_f32, c_f32))
    assert jnp.allclose(h_f32, h_ref, atol=1e-4, rtol=1e-4)
    assert jnp.allclose(c_f32, c_ref, atol=1e-4, rtol=1e-4)

    print("KERNEL_OK")
</pallas_src>

<mosaic_0001>
module attributes {stable_mosaic.version = 11 : i64} {
  func.func @lstm_cell_kernel(%arg0: i32, %arg1: i32, %arg2: memref<16x128xbf16, #tpu.memory_space<vmem>>, %arg3: memref<16x128xf32, #tpu.memory_space<vmem>>, %arg4: memref<128x512xbf16, #tpu.memory_space<vmem>>, %arg5: memref<1x512xf32, #tpu.memory_space<vmem>>, %arg6: memref<16x128xf32, #tpu.memory_space<vmem>>, %arg7: memref<16x128xf32, #tpu.memory_space<vmem>>) attributes {dimension_semantics = [#tpu.dimension_semantics<parallel>, #tpu.dimension_semantics<arbitrary>], iteration_bounds = array<i64: 1, 1>, scalar_prefetch = 0 : i64, scratch_operands = 0 : i64, tpu.core_type = #tpu.core_type<tc>, window_params = [{transform_indices = @transform_0, window_bounds = array<i64: 16, 128>}, {transform_indices = @transform_1, window_bounds = array<i64: 16, 128>}, {transform_indices = @transform_2, window_bounds = array<i64: 128, 512>}, {transform_indices = @transform_3, window_bounds = array<i64: 1, 512>}, {transform_indices = @transform_4, window_bounds = array<i64: 16, 128>}, {transform_indices = @transform_5, window_bounds = array<i64: 16, 128>}]} {
    %c0 = arith.constant 0 : index
    %c0_0 = arith.constant 0 : index
    %0 = vector.load %arg2[%c0, %c0_0] : memref<16x128xbf16, #tpu.memory_space<vmem>>, vector<16x128xbf16>
    %c0_1 = arith.constant 0 : index
    %c0_2 = arith.constant 0 : index
    %1 = vector.load %arg4[%c0_1, %c0_2] : memref<128x512xbf16, #tpu.memory_space<vmem>>, vector<128x512xbf16>
    %cst = arith.constant dense<0.000000e+00> : vector<16x512xf32>
    %2 = tpu.matmul %0, %1, %cst {dimension_numbers = #tpu.dot_dimension_numbers<[1], [0], [0], [1], [0, 0, 1, 1], [], []>} : vector<16x128xbf16>, vector<128x512xbf16>, vector<16x512xf32> -> vector<16x512xf32>
    %c0_3 = arith.constant 0 : index
    %c0_4 = arith.constant 0 : index
    %3 = vector.load %arg5[%c0_3, %c0_4] : memref<1x512xf32, #tpu.memory_space<vmem>>, vector<1x512xf32>
    %4 = vector.broadcast %3 : vector<1x512xf32> to vector<16x512xf32>
    %5 = arith.addf %2, %4 : vector<16x512xf32>
    %6 = vector.extract_strided_slice %5 {offsets = [0, 0], sizes = [16, 128], strides = [1, 1]} : vector<16x512xf32> to vector<16x128xf32>
    %7 = arith.negf %6 : vector<16x128xf32>
    %8 = math.exp %7 : vector<16x128xf32>
    %cst_5 = arith.constant 1.000000e+00 : f32
    %9 = vector.broadcast %cst_5 : f32 to vector<16x128xf32>
    %10 = arith.addf %9, %8 : vector<16x128xf32>
    %11 = arith.divf %9, %10 : vector<16x128xf32>
    %12 = vector.extract_strided_slice %5 {offsets = [0, 128], sizes = [16, 128], strides = [1, 1]} : vector<16x512xf32> to vector<16x128xf32>
    %13 = math.tanh %12 : vector<16x128xf32>
    %14 = vector.extract_strided_slice %5 {offsets = [0, 256], sizes = [16, 128], strides = [1, 1]} : vector<16x512xf32> to vector<16x128xf32>
    %15 = arith.negf %14 : vector<16x128xf32>
    %16 = math.exp %15 : vector<16x128xf32>
    %cst_6 = arith.constant 1.000000e+00 : f32
    %17 = vector.broadcast %cst_6 : f32 to vector<16x128xf32>
    %18 = arith.addf %17, %16 : vector<16x128xf32>
    %19 = arith.divf %17, %18 : vector<16x128xf32>
    %20 = vector.extract_strided_slice %5 {offsets = [0, 384], sizes = [16, 128], strides = [1, 1]} : vector<16x512xf32> to vector<16x128xf32>
    %21 = arith.negf %20 : vector<16x128xf32>
    %22 = math.exp %21 : vector<16x128xf32>
    %cst_7 = arith.constant 1.000000e+00 : f32
    %23 = vector.broadcast %cst_7 : f32 to vector<16x128xf32>
    %24 = arith.addf %23, %22 : vector<16x128xf32>
    %25 = arith.divf %23, %24 : vector<16x128xf32>
    %c0_8 = arith.constant 0 : index
    %c0_9 = arith.constant 0 : index
    %26 = vector.load %arg3[%c0_8, %c0_9] : memref<16x128xf32, #tpu.memory_space<vmem>>, vector<16x128xf32>
    %27 = arith.mulf %19, %26 : vector<16x128xf32>
    %28 = arith.mulf %11, %13 : vector<16x128xf32>
    %29 = arith.addf %27, %28 : vector<16x128xf32>
    %30 = math.tanh %29 : vector<16x128xf32>
    %31 = arith.mulf %25, %30 : vector<16x128xf32>
    %c0_10 = arith.constant 0 : index
    %c0_11 = arith.constant 0 : index
    %32 = vector.load %arg6[%c0_10, %c0_11] : memref<16x128xf32, #tpu.memory_space<vmem>>, vector<16x128xf32>
    tpu.vector_store %arg6[%c0_10, %c0_11], %31 {strides = array<i32>} : memref<16x128xf32, #tpu.memory_space<vmem>>, vector<16x128xf32>,
    %c0_12 = arith.constant 0 : index
    %c0_13 = arith.constant 0 : index
    %33 = vector.load %arg7[%c0_12, %c0_13] : memref<16x128xf32, #tpu.memory_space<vmem>>, vector<16x128xf32>
    tpu.vector_store %arg7[%c0_12, %c0_13], %29 {strides = array<i32>} : memref<16x128xf32, #tpu.memory_space<vmem>>, vector<16x128xf32>,
    return
  }
  func.func @transform_0(%arg0: i32, %arg1: i32) -> (i32, i32) {
    %c0_i32 = arith.constant 0 : i32
    %c0_i32_0 = arith.constant 0 : i32
    return %arg1, %c0_i32 : i32, i32
  }
  func.func @transform_1(%arg0: i32, %arg1: i32) -> (i32, i32) {
    %c0_i32 = arith.constant 0 : i32
    return %arg1, %arg0 : i32, i32
  }
  func.func @transform_2(%arg0: i32, %arg1: i32) -> (i32, i32) {
    %c0_i32 = arith.constant 0 : i32
    %c0_i32_0 = arith.constant 0 : i32
    return %c0_i32, %arg0 : i32, i32
  }
  func.func @transform_3(%arg0: i32, %arg1: i32) -> (i32, i32) {
    %c0_i32 = arith.constant 0 : i32
    %c0_i32_0 = arith.constant 0 : i32
    return %c0_i32, %arg0 : i32, i32
  }
  func.func @transform_4(%arg0: i32, %arg1: i32) -> (i32, i32) {
    %c0_i32 = arith.constant 0 : i32
    return %arg1, %arg0 : i32, i32
  }
  func.func @transform_5(%arg0: i32, %arg1: i32) -> (i32, i32) {
    %c0_i32 = arith.constant 0 : i32
    return %arg1, %arg0 : i32, i32
  }
}

</mosaic_0001>

<llo_original>
// kernel: lstm_cell.1
$region0: #{lstm_cell.1}
  #allocation0 [shape = 'u32[]', space=smem, size = 0x4, offset = 0x4, fixed_abs, tag = 'smem constant byte address 0x4 - core index']
  #allocation1 [shape = 'u32[144,128]{1,0:T(1,128)}', space=vmem, size = 0x12000, scoped, tag = 'internal scratch']
  %s0 = inlined_call_operand.vmem [shape: bf16[16,128], index: 0, kind: input, shape index: {}]
  %s1 = inlined_call_operand.vmem [shape: f32[16,128], index: 1, kind: input, shape index: {}, may-alias: {1,5}]
  %s2 = inlined_call_operand.vmem [shape: bf16[128,512], index: 2, kind: input, shape index: {}]
  %s3 = inlined_call_operand.vmem [shape: f32[1,512], index: 3, kind: input, shape index: {}]
  %s4 = inlined_call_operand.vmem [shape: f32[16,128], index: 4, kind: output, shape index: {0}]
  %s5 = inlined_call_operand.vmem [shape: f32[16,128], index: 5, kind: output, shape index: {1}, may-alias: {1,5}]
  %6 = xla_tuple %s4, %s5
  %s7 = sld [smem:[#allocation0]]
  $region34: #{lstm_cell.1} parent=0
    _
  %s9 = ssub.s32 1, %s7
  %s10 = scalar_select 0, %s9, %s7
  // Predicated region
  $region2: #{lstm_cell.1} parent=0 // pred_check
    _
  $region3: #{lstm_cell.1} parent=0 // pred_check_branch
    %12 = sbr.rel (0) target = $region5
  $region4: #{lstm_cell.1} parent=0 // pred_region
    _
  $region5: #{lstm_cell.1} parent=0 // pred_fallthru
    _
  // Predicated region
  $region6: #{lstm_cell.1} parent=0 // pred_check
    _
  $region7: #{lstm_cell.1} parent=0 // pred_check_branch
    %14 = sbr.rel (0) target = $region9
  $region8: #{lstm_cell.1} parent=0 // pred_region
    _
  $region9: #{lstm_cell.1} parent=0 // pred_fallthru
    _
  // Predicated region
  $region10: #{lstm_cell.1} parent=0 // pred_check
    _
  $region11: #{lstm_cell.1} parent=0 // pred_check_branch
    %16 = sbr.rel (0) target = $region13
  $region12: #{lstm_cell.1} parent=0 // pred_region
    _
  $region13: #{lstm_cell.1} parent=0 // pred_fallthru
    _
  // Predicated region
  $region14: #{lstm_cell.1} parent=0 // pred_check
    _
  $region15: #{lstm_cell.1} parent=0 // pred_check_branch
    %18 = sbr.rel (0) target = $region17
  $region16: #{lstm_cell.1} parent=0 // pred_region
    _
  $region17: #{lstm_cell.1} parent=0 // pred_fallthru
    _
  %v20 = vld [vmem:[%s0] sm:$0xf]
  %v21 = vld [vmem:[%s0 + $0x4] sm:$0xf]
  %v22 = vld [vmem:[%s2] sm:$0xff]
  %v23 = vld [vmem:[%s2 + $0x8] sm:$0xff]
  %v24 = vld [vmem:[%s2 + $0x10] sm:$0xff]
  %v25 = vld [vmem:[%s2 + $0x18] sm:$0xff]
  %v26 = vld [vmem:[%s2 + $0x20] sm:$0xff]
  %v27 = vld [vmem:[%s2 + $0x28] sm:$0xff]
  %v28 = vld [vmem:[%s2 + $0x30] sm:$0xff]
  %v29 = vld [vmem:[%s2 + $0x38] sm:$0xff]
  %v30 = vld [vmem:[%s2 + $0x40] sm:$0xff]
  %v31 = vld [vmem:[%s2 + $0x48] sm:$0xff]
  %v32 = vld [vmem:[%s2 + $0x50] sm:$0xff]
  %v33 = vld [vmem:[%s2 + $0x58] sm:$0xff]
  %v34 = vld [vmem:[%s2 + $0x60] sm:$0xff]
  %v35 = vld [vmem:[%s2 + $0x68] sm:$0xff]
  %v36 = vld [vmem:[%s2 + $0x70] sm:$0xff]
  %v37 = vld [vmem:[%s2 + $0x78] sm:$0xff]
  %v38 = vld [vmem:[%s2 + $0x80] sm:$0xff]
  %v39 = vld [vmem:[%s2 + $0x88] sm:$0xff]
  %v40 = vld [vmem:[%s2 + $0x90] sm:$0xff]
  %v41 = vld [vmem:[%s2 + $0x98] sm:$0xff]
  %v42 = vld [vmem:[%s2 + $0xa0] sm:$0xff]
  %v43 = vld [vmem:[%s2 + $0xa8] sm:$0xff]
  %v44 = vld [vmem:[%s2 + $0xb0] sm:$0xff]
  %v45 = vld [vmem:[%s2 + $0xb8] sm:$0xff]
  %v46 = vld [vmem:[%s2 + $0xc0] sm:$0xff]
  %v47 = vld [vmem:[%s2 + $0xc8] sm:$0xff]
  %v48 = vld [vmem:[%s2 + $0xd0] sm:$0xff]
  %v49 = vld [vmem:[%s2 + $0xd8] sm:$0xff]
  %v50 = vld [vmem:[%s2 + $0xe0] sm:$0xff]
  %v51 = vld [vmem:[%s2 + $0xe8] sm:$0xff]
  %v52 = vld [vmem:[%s2 + $0xf0] sm:$0xff]
  %v53 = vld [vmem:[%s2 + $0xf8] sm:$0xff]
  %v54 = vld [vmem:[%s3] sm:$0xf]
  %v56 = vlaneseq
  %v57 = vshrl.u32 %v56, 7
  %v58 = vsub.s32 0, %v57
  %v59 = vrot.slane %v54, %v58
  %v60 = vlaneseq
  %v61 = vshrl.u32 %v60, 7
  %v62 = vsub.s32 1, %v61
  %v63 = vrot.slane %v54, %v62
  %v64 = vlaneseq
  %v65 = vshrl.u32 %v64, 7
  %v66 = vsub.s32 2, %v65
  %v67 = vrot.slane %v54, %v66
  %v68 = vlaneseq
  %v69 = vshrl.u32 %v68, 7
  %v70 = vsub.s32 3, %v69
  %v71 = vrot.slane %v54, %v70
  %v78 = vunpack.c.l.b16 %v20
  %v79 = vunpack.c.l.b16 %v21
  %v80 = vpack.c.b16 %v79, %v78
  %v114 = vunpack.c.l.b16 %v22
  %v115 = vunpack.c.h.b16 %v22
  %v116 = vunpack.c.l.b16 %v23
  %v117 = vunpack.c.h.b16 %v23
  %v118 = vunpack.c.l.b16 %v24
  %v119 = vunpack.c.h.b16 %v24
  %v120 = vunpack.c.l.b16 %v25
  %v121 = vunpack.c.h.b16 %v25
  %v122 = vunpack.c.l.b16 %v26
  %v123 = vunpack.c.h.b16 %v26
  %v124 = vunpack.c.l.b16 %v27
  %v125 = vunpack.c.h.b16 %v27
  %v126 = vunpack.c.l.b16 %v28
  %v127 = vunpack.c.h.b16 %v28
  %v128 = vunpack.c.l.b16 %v29
  %v129 = vunpack.c.h.b16 %v29
  %v130 = vunpack.c.l.b16 %v30
  %v131 = vunpack.c.h.b16 %v30
  %v132 = vunpack.c.l.b16 %v31
  %v133 = vunpack.c.h.b16 %v31
  %v134 = vunpack.c.l.b16 %v32
  %v135 = vunpack.c.h.b16 %v32
  %v136 = vunpack.c.l.b16 %v33
  %v137 = vunpack.c.h.b16 %v33
  %v138 = vunpack.c.l.b16 %v34
  %v139 = vunpack.c.h.b16 %v34
  %v140 = vunpack.c.l.b16 %v35
  %v141 = vunpack.c.h.b16 %v35
  %v142 = vunpack.c.l.b16 %v36
  %v143 = vunpack.c.h.b16 %v36
  %v144 = vunpack.c.l.b16 %v37
  %v145 = vunpack.c.h.b16 %v37
  %v146 = vunpack.c.l.b16 %v38
  %v147 = vunpack.c.h.b16 %v38
  %v148 = vunpack.c.l.b16 %v39
  %v149 = vunpack.c.h.b16 %v39
  %v150 = vunpack.c.l.b16 %v40
  %v151 = vunpack.c.h.b16 %v40
  %v152 = vunpack.c.l.b16 %v41
  %v153 = vunpack.c.h.b16 %v41
  %v154 = vunpack.c.l.b16 %v42
  %v155 = vunpack.c.h.b16 %v42
  %v156 = vunpack.c.l.b16 %v43
  %v157 = vunpack.c.h.b16 %v43
  %v158 = vunpack.c.l.b16 %v44
  %v159 = vunpack.c.h.b16 %v44
  %v160 = vunpack.c.l.b16 %v45
  %v161 = vunpack.c.h.b16 %v45
  %v162 = vunpack.c.l.b16 %v46
  %v163 = vunpack.c.h.b16 %v46
  %v164 = vunpack.c.l.b16 %v47
  %v165 = vunpack.c.h.b16 %v47
  %v166 = vunpack.c.l.b16 %v48
  %v167 = vunpack.c.h.b16 %v48
  %v168 = vunpack.c.l.b16 %v49
  %v169 = vunpack.c.h.b16 %v49
  %v170 = vunpack.c.l.b16 %v50
  %v171 = vunpack.c.h.b16 %v50
  %v172 = vunpack.c.l.b16 %v51
  %v173 = vunpack.c.h.b16 %v51
  %v174 = vunpack.c.l.b16 %v52
  %v175 = vunpack.c.h.b16 %v52
  %v176 = vunpack.c.l.b16 %v53
  %v177 = vunpack.c.h.b16 %v53
  %v178 = vpack.c.b16 %v118, %v114
  %v179 = vpack.c.b16 %v119, %v115
  %v180 = vpack.c.b16 %v120, %v116
  %v181 = vpack.c.b16 %v121, %v117
  %v182 = vpack.c.b16 %v126, %v122
  %v183 = vpack.c.b16 %v127, %v123
  %v184 = vpack.c.b16 %v128, %v124
  %v185 = vpack.c.b16 %v129, %v125
  %v186 = vpack.c.b16 %v134, %v130
  %v187 = vpack.c.b16 %v135, %v131
  %v188 = vpack.c.b16 %v136, %v132
  %v189 = vpack.c.b16 %v137, %v133
  %v190 = vpack.c.b16 %v142, %v138
  %v191 = vpack.c.b16 %v143, %v139
  %v192 = vpack.c.b16 %v144, %v140
  %v193 = vpack.c.b16 %v145, %v141
  %v194 = vpack.c.b16 %v150, %v146
  %v195 = vpack.c.b16 %v151, %v147
  %v196 = vpack.c.b16 %v152, %v148
  %v197 = vpack.c.b16 %v153, %v149
  %v198 = vpack.c.b16 %v158, %v154
  %v199 = vpack.c.b16 %v159, %v155
  %v200 = vpack.c.b16 %v160, %v156
  %v201 = vpack.c.b16 %v161, %v157
  %v202 = vpack.c.b16 %v166, %v162
  %v203 = vpack.c.b16 %v167, %v163
  %v204 = vpack.c.b16 %v168, %v164
  %v205 = vpack.c.b16 %v169, %v165
  %v206 = vpack.c.b16 %v174, %v170
  %v207 = vpack.c.b16 %v175, %v171
  %v208 = vpack.c.b16 %v176, %v172
  %v209 = vpack.c.b16 %v177, %v173
  %242 = vmatprep.subr.bf16.mxu0 %v207
  %243 = vmatpush1.bf16.msra.mxu0 %v206
  %244 = vmatprep.subr.bf16.mxu0 %v203
  %245 = vmatpush1.bf16.msra.mxu0 %v202
  %246 = vmatprep.subr.bf16.mxu0 %v199
  %247 = vmatpush1.bf16.msra.mxu0 %v198
  %248 = vmatprep.subr.bf16.mxu0 %v195
  %249 = vmatpush1.bf16.msra.mxu0 %v194
  %250 = vmatprep.subr.bf16.mxu0 %v191
  %251 = vmatpush1.bf16.msra.mxu0 %v190
  %252 = vmatprep.subr.bf16.mxu0 %v187
  %253 = vmatpush1.bf16.msra.mxu0 %v186
  %254 = vmatprep.subr.bf16.mxu0 %v183
  %255 = vmatpush1.bf16.msra.mxu0 %v182
  %256 = vmatprep.subr.bf16.mxu0 %v179
  %257 = vmatpush1.bf16.msra.mxu0 %v178
  %258 = vmatprep.subr.bf16.mxu0 0
  %259 = vmatpush2.bf16.msra.mxu0 0
  %260 = vmatprep.subr.bf16.mxu0 0
  %261 = vmatpush2.bf16.msra.mxu0 0
  %262 = vmatprep.subr.bf16.mxu0 0
  %263 = vmatpush2.bf16.msra.mxu0 0
  %264 = vmatprep.subr.bf16.mxu0 0
  %265 = vmatpush2.bf16.msra.mxu0 0
  %266 = vmatprep.subr.bf16.mxu0 0
  %267 = vmatpush2.bf16.msra.mxu0 0
  %268 = vmatprep.subr.bf16.mxu0 0
  %269 = vmatpush2.bf16.msra.mxu0 0
  %270 = vmatprep.subr.bf16.mxu0 0
  %271 = vmatpush2.bf16.msra.mxu0 0
  %272 = vmatprep.subr.bf16.mxu0 0
  %273 = vmatpush2.bf16.msra.mxu0 0
  %274 = vmatprep.mubr.bf16.mxu0 0
  %275 = vmatmul.mubr.bf16.gmra.mxu0 %v80
  %v276 = vpop.f32.mrf.mxu0
  %v277 = vadd.f32 %v59, %v276
  %v278 = vpop.f32.mrf.mxu0
  %v279 = vadd.f32 %v63, %v278
  %v280 = vpop.f32.mrf.mxu0
  %v281 = vadd.f32 %v59, %v280
  %v282 = vpop.f32.mrf.mxu0
  %v283 = vadd.f32 %v63, %v282
  %284 = vdwg.mxu0
  %285 = vmatprep.subr.bf16.mxu0 %v209
  %286 = vmatpush1.bf16.msra.mxu0 %v208
  %287 = vmatprep.subr.bf16.mxu0 %v205
  %288 = vmatpush1.bf16.msra.mxu0 %v204
  %289 = vmatprep.subr.bf16.mxu0 %v201
  %290 = vmatpush1.bf16.msra.mxu0 %v200
  %291 = vmatprep.subr.bf16.mxu0 %v197
  %292 = vmatpush1.bf16.msra.mxu0 %v196
  %293 = vmatprep.subr.bf16.mxu0 %v193
  %294 = vmatpush1.bf16.msra.mxu0 %v192
  %295 = vmatprep.subr.bf16.mxu0 %v189
  %296 = vmatpush1.bf16.msra.mxu0 %v188
  %297 = vmatprep.subr.bf16.mxu0 %v185
  %298 = vmatpush1.bf16.msra.mxu0 %v184
  %299 = vmatprep.subr.bf16.mxu0 %v181
  %300 = vmatpush1.bf16.msra.mxu0 %v180
  %301 = vmatprep.subr.bf16.mxu0 0
  %302 = vmatpush2.bf16.msra.mxu0 0
  %303 = vmatprep.subr.bf16.mxu0 0
  %304 = vmatpush2.bf16.msra.mxu0 0
  %305 = vmatprep.subr.bf16.mxu0 0
  %306 = vmatpush2.bf16.msra.mxu0 0
  %307 = vmatprep.subr.bf16.mxu0 0
  %308 = vmatpush2.bf16.msra.mxu0 0
  %309 = vmatprep.subr.bf16.mxu0 0
  %310 = vmatpush2.bf16.msra.mxu0 0
  %311 = vmatprep.subr.bf16.mxu0 0
  %312 = vmatpush2.bf16.msra.mxu0 0
  %313 = vmatprep.subr.bf16.mxu0 0
  %314 = vmatpush2.bf16.msra.mxu0 0
  %315 = vmatprep.subr.bf16.mxu0 0
  %316 = vmatpush2.bf16.msra.mxu0 0
  %317 = vmatprep.mubr.bf16.mxu0 0
  %318 = vmatmul.mubr.bf16.gmra.mxu0 %v80
  %v319 = vpop.f32.mrf.mxu0
  %v320 = vadd.f32 %v67, %v319
  %v321 = vpop.f32.mrf.mxu0
  %v322 = vadd.f32 %v71, %v321
  %v323 = vpop.f32.mrf.mxu0
  %v324 = vadd.f32 %v67, %v323
  %v325 = vpop.f32.mrf.mxu0
  %v326 = vadd.f32 %v71, %v325
  %327 = vdwg.mxu0
  %v328 = vxor.u32 %v277, 2147483648
  %v329 = vxor.u32 %v281, 2147483648
  %v330 = vmul.f32 %v328, 1.442695
  %v331 = vpow.pop %v330
  %v332 = vmul.f32 %v329, 1.442695
  %v333 = vpow.pop %v332
  %v334 = vadd.f32 %v331, 1.0
  %v335 = vadd.f32 %v333, 1.0
  %v336 = vrcp.pop %v334
  %v337 = vmul.f32 1.0, %v336
  %v338 = vrcp.pop %v335
  %v339 = vmul.f32 1.0, %v338
  %v340 = vtanh.pop %v279
  %v341 = vtanh.pop %v283
  %v342 = vxor.u32 %v320, 2147483648
  %v343 = vxor.u32 %v324, 2147483648
  %v344 = vmul.f32 %v342, 1.442695
  %v345 = vpow.pop %v344
  %v346 = vmul.f32 %v343, 1.442695
  %v347 = vpow.pop %v346
  %v348 = vadd.f32 %v345, 1.0
  %v349 = vadd.f32 %v347, 1.0
  %v350 = vrcp.pop %v348
  %v351 = vmul.f32 1.0, %v350
  %v352 = vrcp.pop %v349
  %v353 = vmul.f32 1.0, %v352
  %v354 = vxor.u32 %v322, 2147483648
  %v355 = vxor.u32 %v326, 2147483648
  %v356 = vmul.f32 %v354, 1.442695
  %v357 = vpow.pop %v356
  %v358 = vmul.f32 %v355, 1.442695
  %v359 = vpow.pop %v358
  %v360 = vadd.f32 %v357, 1.0
  %v361 = vadd.f32 %v359, 1.0
  %v362 = vrcp.pop %v360
  %v363 = vmul.f32 1.0, %v362
  %v364 = vrcp.pop %v361
  %v365 = vmul.f32 1.0, %v364
  %v366 = vld [vmem:[%s1] sm:$0xff]
  %v367 = vld [vmem:[%s1 + $0x8] sm:$0xff]
  %v368 = vmul.f32 %v351, %v366
  %v369 = vmul.f32 %v353, %v367
  %v370 = vmul.f32 %v337, %v340
  %v371 = vmul.f32 %v339, %v341
  %v372 = vadd.f32 %v368, %v370
  %v373 = vadd.f32 %v369, %v371
  %v374 = vtanh.pop %v372
  %v375 = vtanh.pop %v373
  %v376 = vmul.f32 %v363, %v374
  %v377 = vmul.f32 %v365, %v375
  %378 = vst [vmem:[%s4] sm:$0xff] %v376
  %379 = vst [vmem:[%s4 + $0x8] sm:$0xff] %v377
  %380 = vst [vmem:[%s5] sm:$0xff] %v372
  %381 = vst [vmem:[%s5 + $0x8] sm:$0xff] %v373
  // Predicated region
  $region18: #{lstm_cell.1} parent=0 // pred_check
    _
  $region19: #{lstm_cell.1} parent=0 // pred_check_branch
    %383 = sbr.rel (0) target = $region21
  $region20: #{lstm_cell.1} parent=0 // pred_region
    _
  $region21: #{lstm_cell.1} parent=0 // pred_fallthru
    _
  // Predicated region
  $region22: #{lstm_cell.1} parent=0 // pred_check
    _
  $region23: #{lstm_cell.1} parent=0 // pred_check_branch
    %385 = sbr.rel (0) target = $region25
  $region24: #{lstm_cell.1} parent=0 // pred_region
    _
  $region25: #{lstm_cell.1} parent=0 // pred_fallthru
    _
  // Predicated region
  $region26: #{lstm_cell.1} parent=0 // pred_check
    _
  $region27: #{lstm_cell.1} parent=0 // pred_check_branch
    %387 = sbr.rel (0) target = $region29
  $region28: #{lstm_cell.1} parent=0 // pred_region
    _
  $region29: #{lstm_cell.1} parent=0 // pred_fallthru
    _
  // Predicated region
  $region30: #{lstm_cell.1} parent=0 // pred_check
    _
  $region31: #{lstm_cell.1} parent=0 // pred_check_branch
    %389 = sbr.rel (0) target = $region33
  $region32: #{lstm_cell.1} parent=0 // pred_region
    _
  $region33: #{lstm_cell.1} parent=0 // pred_fallthru
    _

</llo_original>
